<compile_context>
chip_gen: v5e
topology: v5e:2x2
jax: 0.10.0
libtpu: 0.0.40
codegen_flags: <defaults>
</compile_context>

<pallas_src>
import jax
import jax.numpy as jnp
from jax.experimental import pallas as pl
from jax.experimental.pallas import tpu as pltpu


def _round_up(v, m):
    return ((v + m - 1) // m) * m


def _cdiv(a, b):
    return -(-a // b)


def _vmem_capacity_bytes():
    """Physical VMEM per TensorCore; conservative fallback = v7x (64 MiB)."""
    try:
        info = pltpu.get_tpu_info()
        cap = getattr(info, "vmem_capacity_bytes", None)
        if cap:
            return int(cap)
    except Exception:
        pass
    return 64 * 1024 * 1024


# -----------------------------------------------------------------------------
# Kernels
# -----------------------------------------------------------------------------
def _linear_block_kernel(x_ref, wt_ref, b_ref, o_ref):
    # x_ref: (tm, K), wt_ref: (K, Npad) already transposed, b_ref: (1, Npad)
    # One full-K dot per block; f32 accumulation on the MXU, bias in f32.
    acc = jnp.dot(x_ref[...], wt_ref[...], preferred_element_type=jnp.float32)
    o_ref[...] = (acc + b_ref[...]).astype(o_ref.dtype)


def _linear_kernel_tiled(x_ref, wt_ref, b_ref, o_ref, acc_ref):
    # grid = (M/tm, N/tn, K/tk); reduction axis (k) last.
    k = pl.program_id(2)

    @pl.when(k == 0)
    def _():
        acc_ref[...] = jnp.zeros_like(acc_ref)

    acc_ref[...] += jnp.dot(x_ref[...], wt_ref[...],
                            preferred_element_type=jnp.float32)

    @pl.when(k == pl.num_programs(2) - 1)
    def _():
        o_ref[...] = (acc_ref[...] + b_ref[...]).astype(o_ref.dtype)


# -----------------------------------------------------------------------------
# Wrapper
# -----------------------------------------------------------------------------
def linear_forward(x, weight, bias, *, compute_dtype=None, force_path=None):
    """y = x @ weight.T + bias  (PyTorch nn.Linear semantics).

    x:      (B, input_size)
    weight: (output_size, input_size)   -- native PyTorch layout
    bias:   (output_size,)
    returns (B, output_size) in x.dtype

    compute_dtype: optionally jnp.bfloat16 (all MXUs are bf16-native; f32
        accumulation is kept inside the kernel). Results then differ from the
        f32 reference at the ~1e-2 level.
    force_path: None | "single" | "resident" | "tiled"  (testing/debug only).
    """
    B, d_in = x.shape
    d_out, d_in_w = weight.shape
    assert d_in == d_in_w, "weight/input feature mismatch"
    out_dtype = x.dtype

    if compute_dtype is not None:
        x = x.astype(compute_dtype)
    in_dtype = x.dtype
    # Pre-transpose W once in the wrapper to (K, N): the kernels then run a
    # standard [M,K]x[K,N] matmul that the MXU consumes natively (this fuses
    # with the one-time N padding below, so it is not an extra HBM pass).
    w_t = weight.astype(in_dtype).T

    isz = jnp.dtype(in_dtype).itemsize
    osz = jnp.dtype(out_dtype).itemsize
    sub = 16 if isz == 2 else 8          # sublane packing: 16 rows/vreg for bf16

    # ---- per-generation VMEM budgets ----------------------------------------
    cap = _vmem_capacity_bytes()                    # 64 MiB (v7x) / 128 MiB (v5e/v6e)
    vmem_limit = int(min(cap * 0.75, 100 * 1024 * 1024))
    single_budget = min(8 * 1024 * 1024, cap // 8)  # whole problem resident
    resident_budget = int(cap * 0.45)               # weight + bias resident

    # ---- lane-dense N padding of W / bias / output ---------------------------
    n_pad = _round_up(d_out, 128)
    w_p = w_t if n_pad == d_out else jnp.pad(w_t, ((0, 0), (0, n_pad - d_out)))
    b_p = jnp.pad(bias.astype(jnp.float32), (0, n_pad - d_out)).reshape(1, n_pad)

    w_bytes = n_pad * d_in * isz
    bias_bytes = n_pad * 4
    m_pad = _round_up(B, sub)
    single_bytes = m_pad * d_in * isz + w_bytes + bias_bytes + m_pad * n_pad * osz

    path = force_path
    if path is None:
        if single_bytes <= single_budget:
            path = "single"
        elif w_bytes + bias_bytes <= resident_budget:
            path = "resident"
        else:
            path = "tiled"

    # =========================================================================
    # Path A: whole problem resident in VMEM, no grid, no pipelining overhead.
    # =========================================================================
    if path == "single":
        x_p = x if m_pad == B else jnp.pad(x, ((0, m_pad - B), (0, 0)))
        out = pl.pallas_call(
            _linear_block_kernel,
            out_shape=jax.ShapeDtypeStruct((m_pad, n_pad), out_dtype),
            in_specs=[
                pl.BlockSpec(memory_space=pltpu.MemorySpace.VMEM),
                pl.BlockSpec(memory_space=pltpu.MemorySpace.VMEM),
                pl.BlockSpec(memory_space=pltpu.MemorySpace.VMEM),
            ],
            out_specs=pl.BlockSpec(memory_space=pltpu.MemorySpace.VMEM),
            compiler_params=pltpu.CompilerParams(vmem_limit_bytes=vmem_limit),
            cost_estimate=pl.CostEstimate(
                flops=2 * m_pad * d_in * n_pad,
                transcendentals=0,
                bytes_accessed=(m_pad * d_in * isz + d_in * n_pad * isz
                                + m_pad * n_pad * osz + bias_bytes)),
        )(x_p, w_p, b_p)
        return out[:B, :d_out]

    # =========================================================================
    # Path B: weight resident in VMEM (loaded once), grid over M tiles only.
    # x is streamed unpadded (ragged M handled by Pallas masking); no K tiling,
    # so no zero-padding of K is needed.  HBM traffic ~= x + out.
    # =========================================================================
    if path == "resident":
        tm = min(512, _round_up(B, sub))
        gm = _cdiv(B, tm)
        if gm == 1 and B > sub:           # keep both TensorCores busy (v7x)
            tm = _round_up(_cdiv(B, 2), sub)
            gm = _cdiv(B, tm)
        # keep resident W + double-buffered x/out tiles inside the VMEM limit
        while (w_bytes + bias_bytes + 2 * tm * d_in * isz
               + 2 * tm * n_pad * osz) > int(vmem_limit * 0.85) and tm > sub:
            tm = max(sub, _round_up(tm // 2, sub))
            gm = _cdiv(B, tm)

        out = pl.pallas_call(
            _linear_block_kernel,
            out_shape=jax.ShapeDtypeStruct((B, n_pad), out_dtype),
            grid_spec=pltpu.PrefetchScalarGridSpec(
                num_scalar_prefetch=0,
                grid=(gm,),
                in_specs=[
                    pl.BlockSpec((tm, d_in), lambda i: (i, 0)),      # x tile
                    pl.BlockSpec((d_in, n_pad), lambda i: (0, 0)),   # W: resident
                    pl.BlockSpec((1, n_pad), lambda i: (0, 0)),      # bias: resident
                ],
                out_specs=pl.BlockSpec((tm, n_pad), lambda i: (i, 0)),
            ),
            compiler_params=pltpu.CompilerParams(
                dimension_semantics=("parallel",),
                vmem_limit_bytes=vmem_limit),
            cost_estimate=pl.CostEstimate(
                flops=2 * B * d_in * n_pad,
                transcendentals=0,
                bytes_accessed=(B * d_in * isz + d_in * n_pad * isz
                                + B * n_pad * osz + bias_bytes)),
        )(x, w_p, b_p)
        return out[:, :d_out]

    # =========================================================================
    # Path C: streamed tiles with K accumulation (weight too big to be resident).
    # =========================================================================
    tm = min(512, _round_up(B, sub))
    tn = min(512, n_pad)
    if d_in <= 1024:
        tk, k_pad = d_in, d_in                       # full K per step, no padding
    else:
        best = None                                  # minimize K-padding slack
        for cand in range(512, 1025, 128):
            slack = _round_up(d_in, cand) - d_in
            key = (slack, -cand)
            if best is None or key < best[0]:
                best = (key, cand)
        tk = best[1]
        k_pad = _round_up(d_in, tk)

    gm, gn, gk = _cdiv(B, tm), _cdiv(n_pad, tn), k_pad // tk
    if gm * gn == 1:                                  # megacore occupancy (v7x)
        if B > sub:
            tm = _round_up(_cdiv(B, 2), sub)
            gm = _cdiv(B, tm)
        elif n_pad > 128:
            tn = _round_up(n_pad // 2, 128)
            gn = _cdiv(n_pad, tn)
    # keep double-buffered tiles + f32 accumulator inside the VMEM limit
    while (2 * (tm * tk + tk * tn) * isz + 2 * tm * tn * osz + tm * tn * 4
           + 2 * tn * 4) > int(vmem_limit * 0.85) and tm > sub:
        tm = max(sub, _round_up(tm // 2, sub))
        gm = _cdiv(B, tm)

    # Only the K axis is materially zero-padded (required for the accumulator);
    # ragged M / N block edges are masked by Pallas.
    x_p = x if k_pad == d_in else jnp.pad(x, ((0, 0), (0, k_pad - d_in)))
    w_pp = w_p if k_pad == d_in else jnp.pad(w_p, ((0, k_pad - d_in), (0, 0)))

    out = pl.pallas_call(
        _linear_kernel_tiled,
        out_shape=jax.ShapeDtypeStruct((B, n_pad), out_dtype),
        grid_spec=pltpu.PrefetchScalarGridSpec(
            num_scalar_prefetch=0,
            grid=(gm, gn, gk),
            in_specs=[
                pl.BlockSpec((tm, tk), lambda i, j, k: (i, k)),   # x
                pl.BlockSpec((tk, tn), lambda i, j, k: (k, j)),   # W^T (K, N)
                pl.BlockSpec((1, tn), lambda i, j, k: (0, j)),    # bias
            ],
            out_specs=pl.BlockSpec((tm, tn), lambda i, j, k: (i, j)),
            scratch_shapes=[pltpu.VMEM((tm, tn), jnp.float32)],
        ),
        compiler_params=pltpu.CompilerParams(
            dimension_semantics=("parallel", "parallel", "arbitrary"),
            vmem_limit_bytes=vmem_limit),
        cost_estimate=pl.CostEstimate(
            flops=2 * B * k_pad * n_pad,
            transcendentals=0,
            bytes_accessed=(B * k_pad * isz + k_pad * n_pad * isz
                            + B * n_pad * osz + bias_bytes)),
    )(x_p, w_pp, b_p)
    return out[:, :d_out]


if __name__ == "__main__":
    key = jax.random.PRNGKey(0)

    # ---- small shapes consistent with LinearRegressionModel -----------------
    batch, input_size, output_size = 8, 32, 1
    kx, kw, kb = jax.random.split(key, 3)
    bound = 1.0 / (input_size ** 0.5)
    weight = jax.random.uniform(kw, (output_size, input_size),
                                minval=-bound, maxval=bound, dtype=jnp.float32)
    bias = jax.random.uniform(kb, (output_size,),
                              minval=-bound, maxval=bound, dtype=jnp.float32)
    x = jax.random.normal(kx, (batch, input_size), dtype=jnp.float32)

    y = jax.block_until_ready(linear_forward(x, weight, bias))
    y_ref = x @ weight.T + bias
    assert y.shape == (batch, output_size)
    assert jnp.allclose(y, y_ref, atol=1e-5, rtol=1e-5), "small-shape mismatch"

    # ---- exercise the weight-resident (M-gridded, no-K-axis) path -----------
    B2, K2, N2 = 256, 512, 256
    kx2, kw2, kb2 = jax.random.split(jax.random.PRNGKey(1), 3)
    w2 = jax.random.normal(kw2, (N2, K2), jnp.float32) * 0.02
    b2 = jax.random.normal(kb2, (N2,), jnp.float32) * 0.02
    x2 = jax.random.normal(kx2, (B2, K2), jnp.float32)
    y2 = jax.block_until_ready(linear_forward(x2, w2, b2, force_path="resident"))
    y2_ref = x2 @ w2.T + b2
    assert y2.shape == (B2, N2)
    assert jnp.allclose(y2, y2_ref, atol=1e-2, rtol=1e-2), "resident-path mismatch"

    # ---- exercise the streamed tiled path (K accumulator, ragged edges) -----
    B3, K3, N3 = 256, 1536, 384
    kx3, kw3, kb3 = jax.random.split(jax.random.PRNGKey(2), 3)
    w3 = jax.random.normal(kw3, (N3, K3), jnp.float32) * 0.02
    b3 = jax.random.normal(kb3, (N3,), jnp.float32) * 0.02
    x3 = jax.random.normal(kx3, (B3, K3), jnp.float32)
    y3 = jax.block_until_ready(linear_forward(x3, w3, b3, force_path="tiled"))
    y3_ref = x3 @ w3.T + b3
    assert y3.shape == (B3, N3)
    assert jnp.allclose(y3, y3_ref, atol=1e-2, rtol=1e-2), "tiled-path mismatch"

    print("KERNEL_OK")
</pallas_src>

<mosaic_0001>
module attributes {stable_mosaic.version = 11 : i64} {
  func.func @_linear_block_kernel(%arg0: memref<8x32xf32, #tpu.memory_space<vmem>>, %arg1: memref<32x128xf32, #tpu.memory_space<vmem>>, %arg2: memref<1x128xf32, #tpu.memory_space<vmem>>, %arg3: memref<8x128xf32, #tpu.memory_space<vmem>>) attributes {dimension_semantics = [], scalar_prefetch = 0 : i64, scratch_operands = 0 : i64, tpu.core_type = #tpu.core_type<tc>} {
    %c0 = arith.constant 0 : index
    %c0_0 = arith.constant 0 : index
    %0 = vector.load %arg0[%c0, %c0_0] : memref<8x32xf32, #tpu.memory_space<vmem>>, vector<8x32xf32>
    %c0_1 = arith.constant 0 : index
    %c0_2 = arith.constant 0 : index
    %1 = vector.load %arg1[%c0_1, %c0_2] : memref<32x128xf32, #tpu.memory_space<vmem>>, vector<32x128xf32>
    %cst = arith.constant dense<0.000000e+00> : vector<8x128xf32>
    %2 = tpu.matmul %0, %1, %cst {dimension_numbers = #tpu.dot_dimension_numbers<[1], [0], [0], [1], [0, 0, 1, 1], [], []>} : vector<8x32xf32>, vector<32x128xf32>, vector<8x128xf32> -> vector<8x128xf32>
    %c0_3 = arith.constant 0 : index
    %c0_4 = arith.constant 0 : index
    %3 = vector.load %arg2[%c0_3, %c0_4] : memref<1x128xf32, #tpu.memory_space<vmem>>, vector<1x128xf32>
    %4 = vector.broadcast %3 : vector<1x128xf32> to vector<8x128xf32>
    %5 = arith.addf %2, %4 : vector<8x128xf32>
    %c0_5 = arith.constant 0 : index
    %c0_6 = arith.constant 0 : index
    %6 = vector.load %arg3[%c0_5, %c0_6] : memref<8x128xf32, #tpu.memory_space<vmem>>, vector<8x128xf32>
    tpu.vector_store %arg3[%c0_5, %c0_6], %5 {strides = array<i32>} : memref<8x128xf32, #tpu.memory_space<vmem>>, vector<8x128xf32>,
    return
  }
}

</mosaic_0001>

<llo_original>
// kernel: tpu_custom_call.1
$region0: #{tpu_custom_call.1}
  #allocation0 [shape = 'u32[]', space=smem, size = 0x4, offset = 0x4, fixed_abs, tag = 'smem constant byte address 0x4 - core index']
  #allocation1 [shape = 'u32[72,128]{1,0:T(1,128)}', space=vmem, size = 0x9000, scoped, tag = 'internal scratch']
  %s0 = inlined_call_operand.hbm [shape: f32[8,32], index: 0, kind: input, shape index: {}]
  %s1 = inlined_call_operand.hbm [shape: f32[32,128], index: 1, kind: input, shape index: {}]
  %s2 = inlined_call_operand.vmem [shape: f32[1,128], index: 2, kind: input, shape index: {}]
  %s3 = inlined_call_operand.hbm [shape: f32[8,128], index: 3, kind: output, shape index: {}]
  %s4 = sld [smem:[#allocation0]]
  $region30: #{tpu_custom_call.1} parent=0
    _
  %s6 = ssub.s32 1, %s4
  %s7 = scalar_select 0, %s6, %s4
  $region1: #{tpu_custom_call.1} parent=0
    #allocation2 [shape = 'u8[4096]{0}', space=vmem, size = 0x1000, scoped, tag = 'input window, operand 0, single buffered']
    #allocation3 [shape = 's32[1]{0}', space=sflag, size = 0x4, scoped, tag = 'scoped memory for tpu_custom_call.1']
    #allocation4 [shape = 's32[1]{0}', space=sflag, size = 0x4, scoped, tag = 'scoped memory for tpu_custom_call.1']
    #allocation5 [shape = 'u8[16384]{0}', space=vmem, size = 0x4000, scoped, tag = 'input window, operand 1, single buffered']
    #allocation6 [shape = 's32[1]{0}', space=sflag, size = 0x4, scoped, tag = 'scoped memory for tpu_custom_call.1']
    #allocation7 [shape = 'u8[4096]{0}', space=vmem, size = 0x1000, scoped, tag = 'output window, operand 0, single buffered']
    %8 = vsyncpa [#allocation3], 0
    %9 = vsyncpa [#allocation6], 0
    %10 = vsyncpa [#allocation4], 0
    // Predicated region
    $region2: #{tpu_custom_call.1} parent=1 // pred_check
      _
    $region3: #{tpu_custom_call.1} parent=1 // pred_check_branch
      %12 = sbr.rel (0) target = $region5
    $region4: #{tpu_custom_call.1} parent=1 // pred_region
      %14 = vsyncadd [#allocation3], 0
      %s16 = sshll.u32 %s0, 4
      %s17 = int_to_ptr.hbm [resolvable:$true] %s16
      %s18 = sshll.u32 [#allocation2], 4
      %s19 = int_to_ptr.vmem [resolvable:$true] %s18
      %21 = dma.hbm_to_vmem [thread:$0]  %s17, 128, %s19, [#allocation3]
    $region5: #{tpu_custom_call.1} parent=1 // pred_fallthru
      _
    // Predicated region
    $region6: #{tpu_custom_call.1} parent=1 // pred_check
      _
    $region7: #{tpu_custom_call.1} parent=1 // pred_check_branch
      %23 = sbr.rel (0) target = $region9
    $region8: #{tpu_custom_call.1} parent=1 // pred_region
      %25 = vsyncadd [#allocation6], 0
      %s26 = sshll.u32 %s1, 4
      %s27 = int_to_ptr.hbm [resolvable:$true] %s26
      %s28 = sshll.u32 [#allocation5], 4
      %s29 = int_to_ptr.vmem [resolvable:$true] %s28
      %34 = dma.hbm_to_vmem [thread:$0]  %s27, 512, %s29, [#allocation6], 128, 128, 8
    $region9: #{tpu_custom_call.1} parent=1 // pred_fallthru
      _
    // Predicated region
    $region10: #{tpu_custom_call.1} parent=1 // pred_check
      _
    $region11: #{tpu_custom_call.1} parent=1 // pred_check_branch
      %36 = sbr.rel (0) target = $region13
    $region12: #{tpu_custom_call.1} parent=1 // pred_region
      _
    $region13: #{tpu_custom_call.1} parent=1 // pred_fallthru
      _
    // Predicated region
    $region14: #{tpu_custom_call.1} parent=1 // pred_check
      _
    $region15: #{tpu_custom_call.1} parent=1 // pred_check_branch
      %38 = sbr.rel (0) target = $region17
    $region16: #{tpu_custom_call.1} parent=1 // pred_region
      %40 = dma.done [#allocation3], 128
    $region17: #{tpu_custom_call.1} parent=1 // pred_fallthru
      _
    // Predicated region
    $region18: #{tpu_custom_call.1} parent=1 // pred_check
      _
    $region19: #{tpu_custom_call.1} parent=1 // pred_check_branch
      %42 = sbr.rel (0) target = $region21
    $region20: #{tpu_custom_call.1} parent=1 // pred_region
      %44 = dma.done [#allocation6], 512
    $region21: #{tpu_custom_call.1} parent=1 // pred_fallthru
      _
    %v45 = vld [vmem:[#allocation2] sm:$0xff]
    %v46 = vld [vmem:[#allocation5] sm:$0xff]
    %v47 = vld [vmem:[#allocation5 + $0x8] sm:$0xff]
    %v48 = vld [vmem:[#allocation5 + $0x10] sm:$0xff]
    %v49 = vld [vmem:[#allocation5 + $0x18] sm:$0xff]
    %v50 = vld [vmem:[%s2] sm:$0x1]
    %v52 = vperm.slane %v50, 0
    %vm54 = vcmask 261120
    %v56 = vsel %vm54, %v45, 0
    %58 = vmatpush.msra.mxu0 0.0
    %59 = vmatpush.msra.mxu0 0.0
    %60 = vmatpush.msra.mxu0 0.0
    %61 = vmatpush.msra.mxu0 0.0
    %62 = vmatpush.msra.mxu0 0.0
    %63 = vmatpush.msra.mxu0 0.0
    %64 = vmatpush.msra.mxu0 0.0
    %65 = vmatpush.msra.mxu0 0.0
    %66 = vmatpush.msra.mxu0 0.0
    %67 = vmatpush.msra.mxu0 0.0
    %68 = vmatpush.msra.mxu0 0.0
    %69 = vmatpush.msra.mxu0 0.0
    %70 = vmatpush.msra.mxu0 %v49
    %71 = vmatpush.msra.mxu0 %v48
    %72 = vmatpush.msra.mxu0 %v47
    %73 = vmatpush.msra.mxu0 %v46
    %74 = vmatmul.f32.gmra.mxu0 %v56
    %v75 = vpop.f32.mrf.mxu0
    %v76 = vadd.f32 %v52, %v75
    %77 = vdwg.mxu0
    %78 = vst [vmem:[#allocation7] sm:$0xff] %v76
    // Predicated region
    $region22: #{tpu_custom_call.1} parent=1 // pred_check
      _
    $region23: #{tpu_custom_call.1} parent=1 // pred_check_branch
      %80 = sbr.rel (0) target = $region25
    $region24: #{tpu_custom_call.1} parent=1 // pred_region
      %82 = vsyncadd [#allocation4], 0
      %s84 = sshll.u32 [#allocation7], 4
      %s85 = int_to_ptr.vmem [resolvable:$true] %s84
      %s86 = sshll.u32 %s3, 4
      %s87 = int_to_ptr.hbm [resolvable:$true] %s86
      %89 = dma.vmem_to_hbm [thread:$0]  %s85, 128, %s87, [#allocation4]
    $region25: #{tpu_custom_call.1} parent=1 // pred_fallthru
      _
    // Predicated region
    $region26: #{tpu_custom_call.1} parent=1 // pred_check
      _
    $region27: #{tpu_custom_call.1} parent=1 // pred_check_branch
      %91 = sbr.rel (0) target = $region29
    $region28: #{tpu_custom_call.1} parent=1 // pred_region
      %93 = dma.done [#allocation4], 128
    $region29: #{tpu_custom_call.1} parent=1 // pred_fallthru
      _
    %94 = vsyncpa [#allocation3], 1
    %95 = vsyncpa [#allocation6], 1
    %96 = vsyncpa [#allocation4], 1

</llo_original>
